<compile_context>
chip_gen: v6e
topology: v6e:2x2x1
jax: 0.10.0
libtpu: 0.0.40
codegen_flags: <defaults>
</compile_context>

<pallas_src>
import functools

import jax
import jax.numpy as jnp
from jax import lax
from jax.experimental import pallas as pl
from jax.experimental.pallas import tpu as pltpu


def _round_up(n, m):
    return ((n + m - 1) // m) * m


def _tpu_topology():
    """Best-effort (vmem_bytes, num_tensorcores). Conservative defaults on failure."""
    vmem_bytes = 64 << 20   # conservative (v7x-sized) default if the query fails
    num_tc = 1
    try:
        info = pltpu.get_tpu_info()
        vmem_bytes = int(getattr(info, "vmem_capacity_bytes", vmem_bytes))
        for name in ("num_tensorcores", "tensorcore_count", "num_cores",
                     "cores_per_chip"):
            v = getattr(info, name, None)
            if isinstance(v, int) and v > 0:
                num_tc = v
                break
    except Exception:
        pass
    try:
        kind = jax.devices()[0].device_kind.lower()
        if "v7" in kind:
            num_tc = max(num_tc, 2)
    except Exception:
        pass
    return vmem_bytes, num_tc


def mlp_kernel(x_ref, w1_ref, b1_ref, w2_ref, b2_ref, o_ref, xn_ref, acc_ref,
               *, inv_d, pad_lanes, approximate_gelu):
    """Row tile i (parallel), hidden tile j (arbitrary/reduction)."""
    j = pl.program_id(1)

    @pl.when(j == 0)
    def _():
        # LayerNorm in f32 on the VPU; statistics corrected for zero-padded lanes.
        x = x_ref[...].astype(jnp.float32)
        mean = jnp.sum(x, axis=-1, keepdims=True) * inv_d
        diff = x - mean
        ssq = jnp.sum(diff * diff, axis=-1, keepdims=True)
        if pad_lanes:  # static Python branch
            ssq = ssq - pad_lanes * mean * mean   # padded lanes contributed (0-mean)^2
        var = ssq * inv_d
        # Padded-lane values of xn are nonzero garbage, but the matching W1 rows are 0.
        xn_ref[...] = (diff * lax.rsqrt(var + 1e-5)).astype(xn_ref.dtype)
        acc_ref[...] = jnp.zeros_like(acc_ref)

    # Linear(dim -> hidden_tile): bf16 operands into the MXU, f32 accumulation.
    h = jnp.dot(xn_ref[...], w1_ref[...], preferred_element_type=jnp.float32)
    h = jax.nn.gelu(h + b1_ref[...], approximate=approximate_gelu)

    # Linear(hidden_tile -> dim), accumulated over the hidden grid axis.
    acc_ref[...] += jnp.dot(h.astype(w2_ref.dtype), w2_ref[...],
                            preferred_element_type=jnp.float32)

    @pl.when(j == pl.num_programs(1) - 1)
    def _():
        o_ref[...] = (acc_ref[...] + b2_ref[...]).astype(o_ref.dtype)


def prepare_mlp_params(gamma, beta, w1, b1, w2, b2, *, mxu_dtype=jnp.bfloat16):
    """Fold LN affine into the first linear, pad feature dims to lane-dense multiples of
    128, and pre-cast weights for the MXU.  Call once; reuse across forward calls."""
    D, H = w1.shape
    Dp = _round_up(D, 128)
    Hp = _round_up(H, 128)

    # Fold LayerNorm affine: (xn*gamma + beta) @ W1 + b1 == xn @ (gamma[:,None]*W1) + (beta@W1 + b1)
    w1f = gamma.astype(jnp.float32)[:, None] * w1.astype(jnp.float32)
    b1f = beta.astype(jnp.float32) @ w1.astype(jnp.float32) + b1.astype(jnp.float32)

    w1p = jnp.zeros((Dp, Hp), mxu_dtype).at[:D, :H].set(w1f.astype(mxu_dtype))
    w2p = jnp.zeros((Hp, Dp), mxu_dtype).at[:H, :D].set(w2.astype(mxu_dtype))
    b1p = jnp.zeros((1, Hp), jnp.float32).at[0, :H].set(b1f)
    b2p = jnp.zeros((1, Dp), jnp.float32).at[0, :D].set(b2.astype(jnp.float32))
    return {"w1": w1p, "b1": b1p, "w2": w2p, "b2": b2p, "dim": D, "hidden": H}


def mlp_forward(x, params, *, io_dtype=jnp.bfloat16, approximate_gelu=True):
    B, S, D = x.shape
    assert params["dim"] == D
    w1p, b1p, w2p, b2p = params["w1"], params["b1"], params["w2"], params["b2"]
    Dp, Hp = w1p.shape
    rows = B * S

    vmem_bytes, num_tc = _tpu_topology()
    vmem_cap = int(vmem_bytes * 0.8)           # ~51 MiB on v7x, ~102 MiB on v5e/v6e
    io_bytes = jnp.dtype(io_dtype).itemsize
    wbytes = jnp.dtype(w1p.dtype).itemsize
    sub = max(8, 32 // io_bytes)               # sublane packing: 8 for f32, 16 for bf16

    # ---- hidden-dim tile: keep double-buffered W1/W2 tiles within ~1/3 of VMEM --------
    weight_budget = vmem_cap // 3
    per_th = 2 * 2 * Dp * wbytes               # one W1 column tile + one W2 row tile, x2 buffers
    th = min(Hp, max(128, (weight_budget // per_th) // 128 * 128))
    while Hp % th:                              # Hp is a multiple of 128, so this terminates
        th -= 128

    # ---- row tile: derive from the remaining VMEM byte budget -------------------------
    per_row = (4 * Dp * io_bytes               # x + out tiles, double-buffered
               + Dp * wbytes                   # xn scratch (mxu dtype)
               + Dp * 4                        # f32 accumulator scratch
               + th * (4 + wbytes))            # headroom for the (tile, th) h intermediate
    row_budget = vmem_cap - 2 * per_th * th // 2 - (Hp + 2 * Dp) * 4 - (4 << 20)
    row_budget = max(row_budget, sub * per_row)
    tile = int(row_budget // per_row)
    tile = min(tile, 16384, _round_up(rows, sub))
    if num_tc >= 2:
        # Split the row axis across TensorCores only where there actually are >= 2.
        tile = min(tile, _round_up(pl.cdiv(rows, num_tc), sub))
    tile = max(sub, (tile // sub) * sub)
    rows_p = _round_up(rows, tile)
    grid = (rows_p // tile, Hp // th)

    # ---- activations: bf16 on the HBM side, zero-padded rows/lanes --------------------
    x2 = x.reshape(rows, D).astype(io_dtype)
    if rows_p != rows or Dp != D:
        x2 = jnp.pad(x2, ((0, rows_p - rows), (0, Dp - D)))

    cost = pl.CostEstimate(
        flops=4 * rows_p * Dp * Hp,                       # two matmuls, 2 flops/MAC
        transcendentals=rows_p * Hp,                      # one tanh/erf per hidden element
        bytes_accessed=(2 * rows_p * Dp * io_bytes        # x in + y out
                        + 2 * Dp * Hp * wbytes            # W1 + W2
                        + (Hp + 2 * Dp) * 4),             # biases
    )

    kernel = functools.partial(
        mlp_kernel,
        inv_d=1.0 / D,
        pad_lanes=Dp - D,
        approximate_gelu=approximate_gelu,
    )

    grid_spec = pltpu.PrefetchScalarGridSpec(
        num_scalar_prefetch=0,
        grid=grid,
        in_specs=[
            pl.BlockSpec((tile, Dp), lambda i, j: (i, 0)),   # x row tile (constant over j)
            pl.BlockSpec((Dp, th), lambda i, j: (0, j)),     # W1 hidden tile
            pl.BlockSpec((1, th), lambda i, j: (0, j)),      # b1 hidden tile (LN-folded)
            pl.BlockSpec((th, Dp), lambda i, j: (j, 0)),     # W2 hidden tile
            pl.BlockSpec((1, Dp), lambda i, j: (0, 0)),      # b2
        ],
        out_specs=pl.BlockSpec((tile, Dp), lambda i, j: (i, 0)),
        scratch_shapes=[
            pltpu.VMEM((tile, Dp), w1p.dtype),   # xn (normalized rows, MXU dtype)
            pltpu.VMEM((tile, Dp), jnp.float32), # f32 accumulator over hidden tiles
        ],
    )

    out2 = pl.pallas_call(
        kernel,
        out_shape=jax.ShapeDtypeStruct((rows_p, Dp), io_dtype),
        grid_spec=grid_spec,
        compiler_params=pltpu.CompilerParams(
            dimension_semantics=("parallel", "arbitrary"),
            vmem_limit_bytes=vmem_cap,
        ),
        cost_estimate=cost,
    )(x2, w1p, b1p, w2p, b2p)

    return out2[:rows, :D].astype(x.dtype).reshape(B, S, D)


def reference_mlp(x, gamma, beta, w1, b1, w2, b2):
    xf = x.astype(jnp.float32)
    mean = jnp.mean(xf, axis=-1, keepdims=True)
    var = jnp.mean((xf - mean) ** 2, axis=-1, keepdims=True)
    xn = (xf - mean) * lax.rsqrt(var + 1e-5) * gamma + beta
    h = jax.nn.gelu(xn @ w1 + b1, approximate=False)   # torch nn.GELU() default = exact
    return (h @ w2 + b2).astype(x.dtype)


if __name__ == "__main__":
    # Small shapes implied by the module: token MLP with dim=32, hidden_dim=64.
    B, S, D, H = 2, 8, 32, 64

    key = jax.random.PRNGKey(0)
    kx, kw1, kb1, kw2, kb2 = jax.random.split(key, 5)

    x = jax.random.normal(kx, (B, S, D), dtype=jnp.float32)

    # Deterministic parameter init (LayerNorm: gamma=1, beta=0; Linears: small normals).
    gamma = jnp.ones((D,), dtype=jnp.float32)
    beta = jnp.zeros((D,), dtype=jnp.float32)
    w1 = jax.random.normal(kw1, (D, H), dtype=jnp.float32) * 0.02
    b1 = jax.random.normal(kb1, (H,), dtype=jnp.float32) * 0.02
    w2 = jax.random.normal(kw2, (H, D), dtype=jnp.float32) * 0.02
    b2 = jax.random.normal(kb2, (D,), dtype=jnp.float32) * 0.02

    params = prepare_mlp_params(gamma, beta, w1, b1, w2, b2)   # fold/pad/cast once
    out = mlp_forward(x, params)
    out = jax.block_until_ready(out)

    ref = reference_mlp(x, gamma, beta, w1, b1, w2, b2)
    assert out.shape == (B, S, D)
    # bf16 activation I/O + bf16 MXU operands + tanh GELU vs the pure-f32/erf reference.
    assert jnp.allclose(out, ref, atol=2e-2, rtol=2e-2), "mismatch vs pure-JAX reference"

    print("KERNEL_OK")
</pallas_src>

<mosaic_0001>
module attributes {stable_mosaic.version = 11 : i64} {
  func.func @mlp_kernel(%arg0: i32, %arg1: i32, %arg2: memref<16x128xbf16, #tpu.memory_space<vmem>>, %arg3: memref<128x128xbf16, #tpu.memory_space<vmem>>, %arg4: memref<1x128xf32, #tpu.memory_space<vmem>>, %arg5: memref<128x128xbf16, #tpu.memory_space<vmem>>, %arg6: memref<1x128xf32, #tpu.memory_space<vmem>>, %arg7: memref<16x128xbf16, #tpu.memory_space<vmem>>, %arg8: memref<16x128xbf16, #tpu.memory_space<vmem>>, %arg9: memref<16x128xf32, #tpu.memory_space<vmem>>) attributes {dimension_semantics = [#tpu.dimension_semantics<parallel>, #tpu.dimension_semantics<arbitrary>], iteration_bounds = array<i64: 1, 1>, scalar_prefetch = 0 : i64, scratch_operands = 2 : i64, tpu.core_type = #tpu.core_type<tc>, window_params = [{transform_indices = @transform_0, window_bounds = array<i64: 16, 128>}, {transform_indices = @transform_1, window_bounds = array<i64: 128, 128>}, {transform_indices = @transform_2, window_bounds = array<i64: 1, 128>}, {transform_indices = @transform_3, window_bounds = array<i64: 128, 128>}, {pipeline_mode = #tpu.pipeline_mode<synchronous>, transform_indices = @transform_4, window_bounds = array<i64: 1, 128>}, {transform_indices = @transform_5, window_bounds = array<i64: 16, 128>}]} {
    %c0_i32 = arith.constant 0 : i32
    %0 = arith.cmpi eq, %arg1, %c0_i32 : i32
    %1 = arith.extui %0 : i1 to i32
    %c0_i32_0 = arith.constant 0 : i32
    %2 = arith.cmpi ne, %1, %c0_i32_0 : i32
    scf.if %2 {
      %c0_19 = arith.constant 0 : index
      %c0_20 = arith.constant 0 : index
      %31 = vector.load %arg2[%c0_19, %c0_20] : memref<16x128xbf16, #tpu.memory_space<vmem>>, vector<16x128xbf16>
      %32 = arith.extf %31 : vector<16x128xbf16> to vector<16x128xf32>
      %cst_21 = arith.constant dense<0.000000e+00> : vector<16xf32>
      %33 = vector.multi_reduction <add>, %32, %cst_21 [1] : vector<16x128xf32> to vector<16xf32>
      %34 = vector.shape_cast %33 : vector<16xf32> to vector<16x1xf32>
      %cst_22 = arith.constant 3.125000e-02 : f32
      %35 = vector.broadcast %cst_22 : f32 to vector<16x1xf32>
      %36 = arith.mulf %34, %35 : vector<16x1xf32>
      %37 = vector.broadcast %36 : vector<16x1xf32> to vector<16x128xf32>
      %38 = arith.subf %32, %37 : vector<16x128xf32>
      %39 = arith.mulf %38, %38 : vector<16x128xf32>
      %cst_23 = arith.constant dense<0.000000e+00> : vector<16xf32>
      %40 = vector.multi_reduction <add>, %39, %cst_23 [1] : vector<16x128xf32> to vector<16xf32>
      %41 = vector.shape_cast %40 : vector<16xf32> to vector<16x1xf32>
      %cst_24 = arith.constant 9.600000e+01 : f32
      %42 = vector.broadcast %cst_24 : f32 to vector<16x1xf32>
      %43 = arith.mulf %42, %36 : vector<16x1xf32>
      %44 = arith.mulf %43, %36 : vector<16x1xf32>
      %45 = arith.subf %41, %44 : vector<16x1xf32>
      %cst_25 = arith.constant 3.125000e-02 : f32
      %46 = vector.broadcast %cst_25 : f32 to vector<16x1xf32>
      %47 = arith.mulf %45, %46 : vector<16x1xf32>
      %cst_26 = arith.constant 9.99999974E-6 : f32
      %48 = vector.broadcast %cst_26 : f32 to vector<16x1xf32>
      %49 = arith.addf %47, %48 : vector<16x1xf32>
      %50 = math.rsqrt %49 : vector<16x1xf32>
      %51 = vector.broadcast %50 : vector<16x1xf32> to vector<16x128xf32>
      %52 = arith.mulf %38, %51 : vector<16x128xf32>
      %53 = arith.truncf %52 : vector<16x128xf32> to vector<16x128xbf16>
      %c0_27 = arith.constant 0 : index
      %c0_28 = arith.constant 0 : index
      %54 = vector.load %arg8[%c0_27, %c0_28] : memref<16x128xbf16, #tpu.memory_space<vmem>>, vector<16x128xbf16>
      tpu.vector_store %arg8[%c0_27, %c0_28], %53 {strides = array<i32>} : memref<16x128xbf16, #tpu.memory_space<vmem>>, vector<16x128xbf16>,
      %cst_29 = arith.constant 0.000000e+00 : f32
      %55 = vector.broadcast %cst_29 : f32 to vector<16x128xf32>
      %c0_30 = arith.constant 0 : index
      %c0_31 = arith.constant 0 : index
      %56 = vector.load %arg9[%c0_30, %c0_31] : memref<16x128xf32, #tpu.memory_space<vmem>>, vector<16x128xf32>
      tpu.vector_store %arg9[%c0_30, %c0_31], %55 {strides = array<i32>} : memref<16x128xf32, #tpu.memory_space<vmem>>, vector<16x128xf32>,
    } else {
    }
    %c0 = arith.constant 0 : index
    %c0_1 = arith.constant 0 : index
    %3 = vector.load %arg8[%c0, %c0_1] : memref<16x128xbf16, #tpu.memory_space<vmem>>, vector<16x128xbf16>
    %c0_2 = arith.constant 0 : index
    %c0_3 = arith.constant 0 : index
    %4 = vector.load %arg3[%c0_2, %c0_3] : memref<128x128xbf16, #tpu.memory_space<vmem>>, vector<128x128xbf16>
    %cst = arith.constant dense<0.000000e+00> : vector<16x128xf32>
    %5 = tpu.matmul %3, %4, %cst {dimension_numbers = #tpu.dot_dimension_numbers<[1], [0], [0], [1], [0, 0, 1, 1], [], []>} : vector<16x128xbf16>, vector<128x128xbf16>, vector<16x128xf32> -> vector<16x128xf32>
    %c0_4 = arith.constant 0 : index
    %c0_5 = arith.constant 0 : index
    %6 = vector.load %arg4[%c0_4, %c0_5] : memref<1x128xf32, #tpu.memory_space<vmem>>, vector<1x128xf32>
    %7 = vector.broadcast %6 : vector<1x128xf32> to vector<16x128xf32>
    %8 = arith.addf %5, %7 : vector<16x128xf32>
    %9 = arith.mulf %8, %8 : vector<16x128xf32>
    %10 = arith.mulf %8, %9 : vector<16x128xf32>
    %cst_6 = arith.constant 4.471500e-02 : f32
    %11 = vector.broadcast %cst_6 : f32 to vector<16x128xf32>
    %12 = arith.mulf %11, %10 : vector<16x128xf32>
    %13 = arith.addf %8, %12 : vector<16x128xf32>
    %cst_7 = arith.constant 0.797884583 : f32
    %14 = vector.broadcast %cst_7 : f32 to vector<16x128xf32>
    %15 = arith.mulf %14, %13 : vector<16x128xf32>
    %16 = math.tanh %15 : vector<16x128xf32>
    %cst_8 = arith.constant 1.000000e+00 : f32
    %17 = vector.broadcast %cst_8 : f32 to vector<16x128xf32>
    %18 = arith.addf %17, %16 : vector<16x128xf32>
    %cst_9 = arith.constant 5.000000e-01 : f32
    %19 = vector.broadcast %cst_9 : f32 to vector<16x128xf32>
    %20 = arith.mulf %19, %18 : vector<16x128xf32>
    %21 = arith.mulf %8, %20 : vector<16x128xf32>
    %c0_10 = arith.constant 0 : index
    %c0_11 = arith.constant 0 : index
    %22 = vector.load %arg9[%c0_10, %c0_11] : memref<16x128xf32, #tpu.memory_space<vmem>>, vector<16x128xf32>
    %23 = arith.truncf %21 : vector<16x128xf32> to vector<16x128xbf16>
    %c0_12 = arith.constant 0 : index
    %c0_13 = arith.constant 0 : index
    %24 = vector.load %arg5[%c0_12, %c0_13] : memref<128x128xbf16, #tpu.memory_space<vmem>>, vector<128x128xbf16>
    %cst_14 = arith.constant dense<0.000000e+00> : vector<16x128xf32>
    %25 = tpu.matmul %23, %24, %cst_14 {dimension_numbers = #tpu.dot_dimension_numbers<[1], [0], [0], [1], [0, 0, 1, 1], [], []>} : vector<16x128xbf16>, vector<128x128xbf16>, vector<16x128xf32> -> vector<16x128xf32>
    %26 = arith.addf %22, %25 : vector<16x128xf32>
    %c0_15 = arith.constant 0 : index
    %c0_16 = arith.constant 0 : index
    %27 = vector.load %arg9[%c0_15, %c0_16] : memref<16x128xf32, #tpu.memory_space<vmem>>, vector<16x128xf32>
    tpu.vector_store %arg9[%c0_15, %c0_16], %26 {strides = array<i32>} : memref<16x128xf32, #tpu.memory_space<vmem>>, vector<16x128xf32>,
    %c0_i32_17 = arith.constant 0 : i32
    %28 = arith.cmpi eq, %arg1, %c0_i32_17 : i32
    %29 = arith.extui %28 : i1 to i32
    %c0_i32_18 = arith.constant 0 : i32
    %30 = arith.cmpi ne, %29, %c0_i32_18 : i32
    scf.if %30 {
      %c0_19 = arith.constant 0 : index
      %c0_20 = arith.constant 0 : index
      %31 = vector.load %arg9[%c0_19, %c0_20] : memref<16x128xf32, #tpu.memory_space<vmem>>, vector<16x128xf32>
      %c0_21 = arith.constant 0 : index
      %c0_22 = arith.constant 0 : index
      %32 = vector.load %arg6[%c0_21, %c0_22] : memref<1x128xf32, #tpu.memory_space<vmem>>, vector<1x128xf32>
      %33 = vector.broadcast %32 : vector<1x128xf32> to vector<16x128xf32>
      %34 = arith.addf %31, %33 : vector<16x128xf32>
      %35 = arith.truncf %34 : vector<16x128xf32> to vector<16x128xbf16>
      %c0_23 = arith.constant 0 : index
      %c0_24 = arith.constant 0 : index
      %36 = vector.load %arg7[%c0_23, %c0_24] : memref<16x128xbf16, #tpu.memory_space<vmem>>, vector<16x128xbf16>
      tpu.vector_store %arg7[%c0_23, %c0_24], %35 {strides = array<i32>} : memref<16x128xbf16, #tpu.memory_space<vmem>>, vector<16x128xbf16>,
    } else {
    }
    return
  }
  func.func @transform_0(%arg0: i32, %arg1: i32) -> (i32, i32) {
    %c0_i32 = arith.constant 0 : i32
    %c0_i32_0 = arith.constant 0 : i32
    return %arg0, %c0_i32 : i32, i32
  }
  func.func @transform_1(%arg0: i32, %arg1: i32) -> (i32, i32) {
    %c0_i32 = arith.constant 0 : i32
    %c0_i32_0 = arith.constant 0 : i32
    return %c0_i32, %arg1 : i32, i32
  }
  func.func @transform_2(%arg0: i32, %arg1: i32) -> (i32, i32) {
    %c0_i32 = arith.constant 0 : i32
    %c0_i32_0 = arith.constant 0 : i32
    return %c0_i32, %arg1 : i32, i32
  }
  func.func @transform_3(%arg0: i32, %arg1: i32) -> (i32, i32) {
    %c0_i32 = arith.constant 0 : i32
    %c0_i32_0 = arith.constant 0 : i32
    return %arg1, %c0_i32 : i32, i32
  }
  func.func @transform_4(%arg0: i32, %arg1: i32) -> (i32, i32) {
    %c0_i32 = arith.constant 0 : i32
    %c0_i32_0 = arith.constant 0 : i32
    %c0_i32_1 = arith.constant 0 : i32
    return %c0_i32, %c0_i32_0 : i32, i32
  }
  func.func @transform_5(%arg0: i32, %arg1: i32) -> (i32, i32) {
    %c0_i32 = arith.constant 0 : i32
    %c0_i32_0 = arith.constant 0 : i32
    return %arg0, %c0_i32 : i32, i32
  }
}

</mosaic_0001>

<llo_original>
// kernel: tpu_custom_call.1
$region0: #{tpu_custom_call.1}
  #allocation0 [shape = 'u32[]', space=smem, size = 0x4, offset = 0x4, fixed_abs, tag = 'smem constant byte address 0x4 - core index']
  #allocation1 [shape = 'u32[144,128]{1,0:T(1,128)}', space=vmem, size = 0x12000, scoped, tag = 'internal scratch']
  #allocation2 [shape = 'bf16[16,128]{1,0:T(8,128)(2,1)}', space=vmem, size = 0x1000, scoped, tag = 'scratch operand']
  #allocation3 [shape = 'f32[16,128]{1,0:T(8,128)}', space=vmem, size = 0x2000, scoped, tag = 'scratch operand']
  %s0 = inlined_call_operand.hbm [shape: bf16[16,128], index: 0, kind: input, shape index: {}]
  %s1 = inlined_call_operand.hbm [shape: bf16[128,128], index: 1, kind: input, shape index: {}]
  %s2 = inlined_call_operand.vmem [shape: f32[1,128], index: 2, kind: input, shape index: {}]
  %s3 = inlined_call_operand.hbm [shape: bf16[128,128], index: 3, kind: input, shape index: {}]
  %s4 = inlined_call_operand.vmem [shape: f32[1,128], index: 4, kind: input, shape index: {}]
  %s5 = inlined_call_operand.hbm [shape: bf16[16,128], index: 5, kind: output, shape index: {}]
  %s6 = sld [smem:[#allocation0]]
  $region50: #{tpu_custom_call.1} parent=0
    _
  %s8 = ssub.s32 1, %s6
  %s9 = scalar_select 0, %s8, %s6
  $region1: #{tpu_custom_call.1} parent=0
    #allocation4 [shape = 'u8[4096]{0}', space=vmem, size = 0x1000, scoped, tag = 'input window, operand 0, single buffered']
    #allocation5 [shape = 's32[1]{0}', space=sflag, size = 0x4, scoped, tag = 'scoped memory for tpu_custom_call.1']
    #allocation6 [shape = 's32[1]{0}', space=sflag, size = 0x4, scoped, tag = 'scoped memory for tpu_custom_call.1']
    #allocation7 [shape = 'u8[32768]{0}', space=vmem, size = 0x8000, scoped, tag = 'input window, operand 1, single buffered']
    #allocation8 [shape = 's32[1]{0}', space=sflag, size = 0x4, scoped, tag = 'scoped memory for tpu_custom_call.1']
    #allocation9 [shape = 'u8[32768]{0}', space=vmem, size = 0x8000, scoped, tag = 'input window, operand 3, single buffered']
    #allocation10 [shape = 'u8[4096]{0}', space=vmem, size = 0x1000, scoped, tag = 'output window, operand 0, single buffered']
    %10 = vsyncpa [#allocation5], 0
    %11 = vsyncpa [#allocation8], 0
    %12 = vsyncpa [#allocation6], 0
    // Predicated region
    $region2: #{tpu_custom_call.1} parent=1 // pred_check
      _
    $region3: #{tpu_custom_call.1} parent=1 // pred_check_branch
      %14 = sbr.rel (0) target = $region5
    $region4: #{tpu_custom_call.1} parent=1 // pred_region
      %s16 = ssub.s32 128, 128
      %17 = vsyncadd [#allocation5], %s16
      %s18 = sshll.u32 [#allocation4], 4
      %s19 = int_to_ptr.vmem [resolvable:$true] %s18
      %24 = dma.hbm_to_vmem [thread:$0]  %s0, 128, %s19, [#allocation5], 64, 64, 4
    $region5: #{tpu_custom_call.1} parent=1 // pred_fallthru
      _
    // Predicated region
    $region6: #{tpu_custom_call.1} parent=1 // pred_check
      _
    $region7: #{tpu_custom_call.1} parent=1 // pred_check_branch
      %26 = sbr.rel (0) target = $region9
    $region8: #{tpu_custom_call.1} parent=1 // pred_region
      %s28 = ssub.s32 1024, 1024
      %29 = vsyncadd [#allocation8], %s28
      %s30 = sshll.u32 [#allocation7], 4
      %s31 = int_to_ptr.vmem [resolvable:$true] %s30
      %36 = dma.hbm_to_vmem [thread:$0]  %s1, 1024, %s31, [#allocation8], 64, 64, 4
    $region9: #{tpu_custom_call.1} parent=1 // pred_fallthru
      _
    // Predicated region
    $region10: #{tpu_custom_call.1} parent=1 // pred_check
      _
    $region11: #{tpu_custom_call.1} parent=1 // pred_check_branch
      %38 = sbr.rel (0) target = $region13
    $region12: #{tpu_custom_call.1} parent=1 // pred_region
      _
    $region13: #{tpu_custom_call.1} parent=1 // pred_fallthru
      _
    // Predicated region
    $region14: #{tpu_custom_call.1} parent=1 // pred_check
      _
    $region15: #{tpu_custom_call.1} parent=1 // pred_check_branch
      %40 = sbr.rel (0) target = $region17
    $region16: #{tpu_custom_call.1} parent=1 // pred_region
      %s42 = ssub.s32 1024, 1024
      %43 = vsyncadd [#allocation8], %s42
      %s44 = sshll.u32 [#allocation9], 4
      %s45 = int_to_ptr.vmem [resolvable:$true] %s44
      %50 = dma.hbm_to_vmem [thread:$0]  %s3, 1024, %s45, [#allocation8], 64, 64, 4
    $region17: #{tpu_custom_call.1} parent=1 // pred_fallthru
      _
    // Predicated region
    $region18: #{tpu_custom_call.1} parent=1 // pred_check
      _
    $region19: #{tpu_custom_call.1} parent=1 // pred_check_branch
      %52 = sbr.rel (0) target = $region21
    $region20: #{tpu_custom_call.1} parent=1 // pred_region
      _
    $region21: #{tpu_custom_call.1} parent=1 // pred_fallthru
      _
    // Predicated region
    $region22: #{tpu_custom_call.1} parent=1 // pred_check
      _
    $region23: #{tpu_custom_call.1} parent=1 // pred_check_branch
      %54 = sbr.rel (0) target = $region25
    $region24: #{tpu_custom_call.1} parent=1 // pred_region
      %55 = dma.done [#allocation5], 128
    $region25: #{tpu_custom_call.1} parent=1 // pred_fallthru
      _
    // Predicated region
    $region26: #{tpu_custom_call.1} parent=1 // pred_check
      _
    $region27: #{tpu_custom_call.1} parent=1 // pred_check_branch
      %57 = sbr.rel (0) target = $region29
    $region28: #{tpu_custom_call.1} parent=1 // pred_region
      %58 = dma.done [#allocation8], 1024
    $region29: #{tpu_custom_call.1} parent=1 // pred_fallthru
      _
    // Predicated region
    $region30: #{tpu_custom_call.1} parent=1 // pred_check
      _
    $region31: #{tpu_custom_call.1} parent=1 // pred_check_branch
      %60 = sbr.rel (0) target = $region33
    $region32: #{tpu_custom_call.1} parent=1 // pred_region
      %61 = dma.done [#allocation8], 1024
    $region33: #{tpu_custom_call.1} parent=1 // pred_fallthru
      _
    %p63 = scmp.eq.s32.totalorder 0, 0
    // Predicated region
    $region34: #{tpu_custom_call.1} parent=1 // pred_check
      %p64 = pneg %p63
    $region35: #{tpu_custom_call.1} parent=1 // pred_check_branch
      %66 = sbr.rel (%p64) target = $region37
    $region36: #{tpu_custom_call.1} parent=1 // pred_region
      %v67 = vld [vmem:[#allocation4] sm:$0xf]
      %v68 = vld [vmem:[#allocation4 + $0x4] sm:$0xf]
      %v69 = vunpack.c.l.bf16 %v67
      %v70 = vunpack.c.l.bf16 %v68
      %71 = vadd.xlane.f32.xlu0 %v69
      %v72 = vpop.xlane.xlu0 %71
      %73 = vadd.xlane.f32.xlu0 %v70
      %v74 = vpop.xlane.xlu0 %73
      %v75 = vmul.f32 %v72, 0.03125
      %v76 = vmul.f32 %v74, 0.03125
      %v77 = vsub.f32 %v69, %v75
      %v78 = vsub.f32 %v70, %v76
      %v79 = vmul.f32 %v77, %v77
      %v80 = vmul.f32 %v78, %v78
      %81 = vadd.xlane.f32.xlu0 %v79
      %v82 = vpop.xlane.xlu0 %81
      %83 = vadd.xlane.f32.xlu0 %v80
      %v84 = vpop.xlane.xlu0 %83
      %v85 = vmul.f32 %v75, 96.0
      %v86 = vmul.f32 %v76, 96.0
      %v87 = vmul.f32 %v85, %v75
      %v88 = vmul.f32 %v86, %v76
      %v89 = vsub.f32 %v82, %v87
      %v90 = vsub.f32 %v84, %v88
      %v91 = vmul.f32 %v89, 0.03125
      %v92 = vmul.f32 %v90, 0.03125
      %v93 = vadd.f32 %v91, 1e-05
      %v94 = vadd.f32 %v92, 1e-05
      %v95 = vrsqrt.pop %v93
      %v96 = vrsqrt.pop %v94
      %v97 = vmul.f32 %v77, %v95
      %v98 = vmul.f32 %v78, %v96
      %v99 = vpack.c.bf16 %v98, %v97
      %v101 = vunpack.c.l.b16 %v99
      %v102 = vunpack.c.h.b16 %v99
      %v103 = vpack.c.b16 %v101, %v101
      %v104 = vpack.c.b16 %v102, %v102
      %107 = vst [vmem:[#allocation2] sm:$0xf] %v103
      %108 = vst [vmem:[#allocation2 + $0x4] sm:$0xf] %v104
      %109 = vst [vmem:[#allocation3] sm:$0xff] 0.0
      %110 = vst [vmem:[#allocation3 + $0x8] sm:$0xff] 0.0
    $region37: #{tpu_custom_call.1} parent=1 // pred_fallthru
      _
    %v111 = vld [vmem:[#allocation2] sm:$0xf]
    %v112 = vld [vmem:[#allocation2 + $0x4] sm:$0xf]
    %v113 = vld [vmem:[#allocation7] sm:$0xf]
    %v114 = vld [vmem:[#allocation7 + $0x4] sm:$0xf]
    %v115 = vld [vmem:[#allocation7 + $0x8] sm:$0xf]
    %v116 = vld [vmem:[#allocation7 + $0xc] sm:$0xf]
    %v117 = vld [vmem:[#allocation7 + $0x10] sm:$0xf]
    %v118 = vld [vmem:[#allocation7 + $0x14] sm:$0xf]
    %v119 = vld [vmem:[#allocation7 + $0x18] sm:$0xf]
    %v120 = vld [vmem:[#allocation7 + $0x1c] sm:$0xf]
    %v121 = vld [vmem:[#allocation7 + $0x20] sm:$0xf]
    %v122 = vld [vmem:[#allocation7 + $0x24] sm:$0xf]
    %v123 = vld [vmem:[#allocation7 + $0x28] sm:$0xf]
    %v124 = vld [vmem:[#allocation7 + $0x2c] sm:$0xf]
    %v125 = vld [vmem:[#allocation7 + $0x30] sm:$0xf]
    %v126 = vld [vmem:[#allocation7 + $0x34] sm:$0xf]
    %v127 = vld [vmem:[#allocation7 + $0x38] sm:$0xf]
    %v128 = vld [vmem:[#allocation7 + $0x3c] sm:$0xf]
    %v129 = vld [vmem:[%s2] sm:$0x1]
    %v131 = vlaneseq
    %v132 = vshrl.u32 %v131, 7
    %v133 = vsub.s32 0, %v132
    %v134 = vrot.slane %v129, %v133
    %v138 = vunpack.c.l.b16 %v111
    %v139 = vunpack.c.l.b16 %v112
    %v140 = vpack.c.b16 %v139, %v138
    %v158 = vunpack.c.l.b16 %v113
    %v159 = vunpack.c.l.b16 %v114
    %v160 = vunpack.c.l.b16 %v115
    %v161 = vunpack.c.l.b16 %v116
    %v162 = vunpack.c.l.b16 %v117
    %v163 = vunpack.c.l.b16 %v118
    %v164 = vunpack.c.l.b16 %v119
    %v165 = vunpack.c.l.b16 %v120
    %v166 = vunpack.c.l.b16 %v121
    %v167 = vunpack.c.l.b16 %v122
    %v168 = vunpack.c.l.b16 %v123
    %v169 = vunpack.c.l.b16 %v124
    %v170 = vunpack.c.l.b16 %v125
    %v171 = vunpack.c.l.b16 %v126
    %v172 = vunpack.c.l.b16 %v127
    %v173 = vunpack.c.l.b16 %v128
    %v174 = vpack.c.b16 %v159, %v158
    %v175 = vpack.c.b16 %v161, %v160
    %v176 = vpack.c.b16 %v163, %v162
    %v177 = vpack.c.b16 %v165, %v164
    %v178 = vpack.c.b16 %v167, %v166
    %v179 = vpack.c.b16 %v169, %v168
    %v180 = vpack.c.b16 %v171, %v170
    %v181 = vpack.c.b16 %v173, %v172
    %190 = vmatprep.subr.bf16.mxu0 0
    %191 = vmatpush1.bf16.msra.mxu0 %v181
    %192 = vmatprep.subr.bf16.mxu0 0
    %193 = vmatpush1.bf16.msra.mxu0 %v180
    %194 = vmatprep.subr.bf16.mxu0 0
    %195 = vmatpush1.bf16.msra.mxu0 %v179
    %196 = vmatprep.subr.bf16.mxu0 0
    %197 = vmatpush1.bf16.msra.mxu0 %v178
    %198 = vmatprep.subr.bf16.mxu0 0
    %199 = vmatpush1.bf16.msra.mxu0 %v177
    %200 = vmatprep.subr.bf16.mxu0 0
    %201 = vmatpush1.bf16.msra.mxu0 %v176
    %202 = vmatprep.subr.bf16.mxu0 0
    %203 = vmatpush1.bf16.msra.mxu0 %v175
    %204 = vmatprep.subr.bf16.mxu0 0
    %205 = vmatpush1.bf16.msra.mxu0 %v174
    %206 = vmatprep.subr.bf16.mxu0 0
    %207 = vmatpush2.bf16.msra.mxu0 0
    %208 = vmatprep.subr.bf16.mxu0 0
    %209 = vmatpush2.bf16.msra.mxu0 0
    %210 = vmatprep.subr.bf16.mxu0 0
    %211 = vmatpush2.bf16.msra.mxu0 0
    %212 = vmatprep.subr.bf16.mxu0 0
    %213 = vmatpush2.bf16.msra.mxu0 0
    %214 = vmatprep.subr.bf16.mxu0 0
    %215 = vmatpush2.bf16.msra.mxu0 0
    %216 = vmatprep.subr.bf16.mxu0 0
    %217 = vmatpush2.bf16.msra.mxu0 0
    %218 = vmatprep.subr.bf16.mxu0 0
    %219 = vmatpush2.bf16.msra.mxu0 0
    %220 = vmatprep.subr.bf16.mxu0 0
    %221 = vmatpush2.bf16.msra.mxu0 0
    %222 = vmatprep.mubr.bf16.mxu0 0
    %223 = vmatmul.mubr.bf16.gmra.mxu0 %v140
    %v224 = vpop.f32.mrf.mxu0
    %v225 = vadd.f32 %v134, %v224
    %v226 = vpop.f32.mrf.mxu0
    %v227 = vpop.f32.mrf.mxu0
    %v228 = vadd.f32 %v134, %v227
    %v229 = vpop.f32.mrf.mxu0
    %230 = vdwg.mxu0
    %v231 = vmul.f32 %v225, %v225
    %v232 = vmul.f32 %v228, %v228
    %v233 = vmul.f32 %v225, %v231
    %v234 = vmul.f32 %v228, %v232
    %v235 = vmul.f32 %v233, 0.044715
    %v236 = vmul.f32 %v234, 0.044715
    %v237 = vadd.f32 %v225, %v235
    %v238 = vadd.f32 %v228, %v236
    %v239 = vmul.f32 %v237, 0.7978846
    %v240 = vmul.f32 %v238, 0.7978846
    %v241 = vtanh.pop %v239
    %v242 = vtanh.pop %v240
    %v243 = vadd.f32 %v241, 1.0
    %v244 = vadd.f32 %v242, 1.0
    %v245 = vmul.f32 %v243, 0.5
    %v246 = vmul.f32 %v244, 0.5
    %v247 = vmul.f32 %v225, %v245
    %v248 = vmul.f32 %v228, %v246
    %v249 = vld [vmem:[#allocation3] sm:$0xff]
    %v250 = vld [vmem:[#allocation3 + $0x8] sm:$0xff]
    %v251 = vpack.c.bf16 %v248, %v247
    %v252 = vld [vmem:[#allocation9] sm:$0xf]
    %v253 = vld [vmem:[#allocation9 + $0x4] sm:$0xf]
    %v254 = vld [vmem:[#allocation9 + $0x8] sm:$0xf]
    %v255 = vld [vmem:[#allocation9 + $0xc] sm:$0xf]
    %v256 = vld [vmem:[#allocation9 + $0x10] sm:$0xf]
    %v257 = vld [vmem:[#allocation9 + $0x14] sm:$0xf]
    %v258 = vld [vmem:[#allocation9 + $0x18] sm:$0xf]
    %v259 = vld [vmem:[#allocation9 + $0x1c] sm:$0xf]
    %v260 = vld [vmem:[#allocation9 + $0x20] sm:$0xf]
    %v261 = vld [vmem:[#allocation9 + $0x24] sm:$0xf]
    %v262 = vld [vmem:[#allocation9 + $0x28] sm:$0xf]
    %v263 = vld [vmem:[#allocation9 + $0x2c] sm:$0xf]
    %v264 = vld [vmem:[#allocation9 + $0x30] sm:$0xf]
    %v265 = vld [vmem:[#allocation9 + $0x34] sm:$0xf]
    %v266 = vld [vmem:[#allocation9 + $0x38] sm:$0xf]
    %v267 = vld [vmem:[#allocation9 + $0x3c] sm:$0xf]
    %v284 = vunpack.c.l.b16 %v252
    %v285 = vunpack.c.l.b16 %v253
    %v286 = vunpack.c.l.b16 %v254
    %v287 = vunpack.c.l.b16 %v255
    %v288 = vunpack.c.l.b16 %v256
    %v289 = vunpack.c.l.b16 %v257
    %v290 = vunpack.c.l.b16 %v258
    %v291 = vunpack.c.l.b16 %v259
    %v292 = vunpack.c.l.b16 %v260
    %v293 = vunpack.c.l.b16 %v261
    %v294 = vunpack.c.l.b16 %v262
    %v295 = vunpack.c.l.b16 %v263
    %v296 = vunpack.c.l.b16 %v264
    %v297 = vunpack.c.l.b16 %v265
    %v298 = vunpack.c.l.b16 %v266
    %v299 = vunpack.c.l.b16 %v267
    %v300 = vpack.c.b16 %v285, %v284
    %v301 = vpack.c.b16 %v287, %v286
    %v302 = vpack.c.b16 %v289, %v288
    %v303 = vpack.c.b16 %v291, %v290
    %v304 = vpack.c.b16 %v293, %v292
    %v305 = vpack.c.b16 %v295, %v294
    %v306 = vpack.c.b16 %v297, %v296
    %v307 = vpack.c.b16 %v299, %v298
    %316 = vmatprep.subr.bf16.mxu0 0
    %317 = vmatpush1.bf16.msra.mxu0 %v307
    %318 = vmatprep.subr.bf16.mxu0 0
    %319 = vmatpush1.bf16.msra.mxu0 %v306
    %320 = vmatprep.subr.bf16.mxu0 0
    %321 = vmatpush1.bf16.msra.mxu0 %v305
    %322 = vmatprep.subr.bf16.mxu0 0
    %323 = vmatpush1.bf16.msra.mxu0 %v304
    %324 = vmatprep.subr.bf16.mxu0 0
    %325 = vmatpush1.bf16.msra.mxu0 %v303
    %326 = vmatprep.subr.bf16.mxu0 0
    %327 = vmatpush1.bf16.msra.mxu0 %v302
    %328 = vmatprep.subr.bf16.mxu0 0
    %329 = vmatpush1.bf16.msra.mxu0 %v301
    %330 = vmatprep.subr.bf16.mxu0 0
    %331 = vmatpush1.bf16.msra.mxu0 %v300
    %332 = vmatprep.subr.bf16.mxu0 0
    %333 = vmatpush2.bf16.msra.mxu0 0
    %334 = vmatprep.subr.bf16.mxu0 0
    %335 = vmatpush2.bf16.msra.mxu0 0
    %336 = vmatprep.subr.bf16.mxu0 0
    %337 = vmatpush2.bf16.msra.mxu0 0
    %338 = vmatprep.subr.bf16.mxu0 0
    %339 = vmatpush2.bf16.msra.mxu0 0
    %340 = vmatprep.subr.bf16.mxu0 0
    %341 = vmatpush2.bf16.msra.mxu0 0
    %342 = vmatprep.subr.bf16.mxu0 0
    %343 = vmatpush2.bf16.msra.mxu0 0
    %344 = vmatprep.subr.bf16.mxu0 0
    %345 = vmatpush2.bf16.msra.mxu0 0
    %346 = vmatprep.subr.bf16.mxu0 0
    %347 = vmatpush2.bf16.msra.mxu0 0
    %348 = vmatprep.mubr.bf16.mxu0 0
    %349 = vmatmul.mubr.bf16.gmra.mxu0 %v251
    %v350 = vpop.f32.mrf.mxu0
    %v351 = vadd.f32 0.0, %v350
    %v352 = vpop.f32.mrf.mxu0
    %v353 = vpop.f32.mrf.mxu0
    %v354 = vadd.f32 0.0, %v353
    %v355 = vpop.f32.mrf.mxu0
    %356 = vdwg.mxu0
    %v357 = vadd.f32 %v249, %v351
    %v358 = vadd.f32 %v250, %v354
    %359 = vst [vmem:[#allocation3] sm:$0xff] %v357
    %360 = vst [vmem:[#allocation3 + $0x8] sm:$0xff] %v358
    // Predicated region
    $region38: #{tpu_custom_call.1} parent=1 // pred_check
      %p361 = pneg %p63
    $region39: #{tpu_custom_call.1} parent=1 // pred_check_branch
      %363 = sbr.rel (%p361) target = $region41
    $region40: #{tpu_custom_call.1} parent=1 // pred_region
      %v364 = vld [vmem:[#allocation3] sm:$0xff]
      %v365 = vld [vmem:[#allocation3 + $0x8] sm:$0xff]
      %v366 = vld [vmem:[%s4] sm:$0x1]
      %v368 = vlaneseq
      %v369 = vshrl.u32 %v368, 7
      %v370 = vsub.s32 0, %v369
      %v371 = vrot.slane %v366, %v370
      %v373 = vadd.f32 %v364, %v371
      %v374 = vadd.f32 %v365, %v371
      %v375 = vpack.c.bf16 %v374, %v373
      %v377 = vunpack.c.l.b16 %v375
      %v378 = vunpack.c.h.b16 %v375
      %v379 = vpack.c.b16 %v377, %v377
      %v380 = vpack.c.b16 %v378, %v378
      %383 = vst [vmem:[#allocation10] sm:$0xf] %v379
      %384 = vst [vmem:[#allocation10 + $0x4] sm:$0xf] %v380
    $region41: #{tpu_custom_call.1} parent=1 // pred_fallthru
      _
    // Predicated region
    $region42: #{tpu_custom_call.1} parent=1 // pred_check
      _
    $region43: #{tpu_custom_call.1} parent=1 // pred_check_branch
      %386 = sbr.rel (0) target = $region45
    $region44: #{tpu_custom_call.1} parent=1 // pred_region
      %s388 = ssub.s32 128, 128
      %389 = vsyncadd [#allocation6], %s388
      %s390 = sshll.u32 [#allocation10], 4
      %s391 = int_to_ptr.vmem [resolvable:$true] %s390
      %396 = dma.vmem_to_hbm [thread:$0]  %s391, 128, %s5, [#allocation6], 64, 64, 4
    $region45: #{tpu_custom_call.1} parent=1 // pred_fallthru
      _
    // Predicated region
    $region46: #{tpu_custom_call.1} parent=1 // pred_check
      _
    $region47: #{tpu_custom_call.1} parent=1 // pred_check_branch
      %398 = sbr.rel (0) target = $region49
    $region48: #{tpu_custom_call.1} parent=1 // pred_region
      %399 = dma.done [#allocation6], 128
    $region49: #{tpu_custom_call.1} parent=1 // pred_fallthru
      _
    %400 = vsyncpa [#allocation5], 1
    %401 = vsyncpa [#allocation8], 1
    %402 = vsyncpa [#allocation6], 1

</llo_original>
